<compile_context>
chip_gen: v6e
topology: v6e:2x2x1
jax: 0.10.0
libtpu: 0.0.40
codegen_flags: <defaults>
</compile_context>

<pallas_src>
import functools

import jax
import jax.numpy as jnp
from jax.experimental import pallas as pl
from jax.experimental.pallas import tpu as pltpu


def _tgcn_fft_kernel(x_ref, a_ref, w_ref, b_ref, o_ref, *, t, fin):
    xc = x_ref[...]            # (N, T*Fin)    col-block s = input[:, :, s]
    ac = a_ref[...]            # (N, T*N)      col-block s = adj[:, :, s]

    # Block circulant of the INPUT (depends only on a kernel input, so it can be
    # built before / overlapped with the first matmul):
    #   circ_x[s*N + j, u*Fin + f] = input[j, f, (u - s) mod T]
    blocks = [xc]
    for s in range(1, t):
        blocks.append(pltpu.roll(xc, shift=s * fin, axis=1))   # static lane vrot (XLU)
    circ_x = jnp.concatenate(blocks, axis=0)                   # (T*N, T*Fin)

    # temp[:, u*Fin + f] = (adj (*) input)[:, f, u]            -- one MXU matmul
    temp = jnp.dot(ac, circ_x, preferred_element_type=jnp.float32)

    # out[:, r*T + u] = ((adj (*) input) (*) weight)[:, r, u] + bias[:, r, u]
    # (w_ref is the precomputed weight circulant; no XLU work between matmuls)
    out = jnp.dot(temp, w_ref[...], preferred_element_type=jnp.float32) + b_ref[...]
    o_ref[...] = out.astype(o_ref.dtype)


def prepare_params(weight, bias):
    """One-time (per parameter value) layout work, kept OUT of the hot path.

    circ_w[s*Fin + f, r*T + u] = weight[f, r, (u - s) mod T]
    The feature-major (r*T + u) column order means the kernel output reshapes
    directly into (N, Fout, T) and the bias is just bias.reshape(N, Fout*T).
    """
    fin, fout, t = weight.shape
    shifted = jnp.stack([jnp.roll(weight, s, axis=-1) for s in range(t)], axis=0)
    circ_w = shifted.reshape(t * fin, fout * t)            # (T*Fin, Fout*T)
    bias_slab = bias.reshape(bias.shape[0], fout * t)      # (N,     Fout*T)
    return circ_w, bias_slab


@jax.jit
def tensor_graph_convolution_fft(inp, adj, circ_w, bias_slab):
    """inp (N, Fin, T), adj (N, N, T); circ_w/bias_slab from prepare_params.
    Returns (N, Fout, T)."""
    n, fin, t = inp.shape
    fout = bias_slab.shape[1] // t

    # Hot-path layout plumbing only: fold the tiny channel axis into the lane
    # axis so both MXU operands are lane-dense.
    xc = jnp.transpose(inp, (0, 2, 1)).reshape(n, t * fin)   # (N, T*Fin) = (16, 128)
    ac = jnp.transpose(adj, (0, 2, 1)).reshape(n, t * n)     # (N, T*N)   = (16, 64)

    out_c = pl.pallas_call(
        functools.partial(_tgcn_fft_kernel, t=t, fin=fin),
        out_shape=jax.ShapeDtypeStruct((n, fout * t), jnp.float32),
        in_specs=[pl.BlockSpec(memory_space=pltpu.MemorySpace.VMEM)] * 4,
        out_specs=pl.BlockSpec(memory_space=pltpu.MemorySpace.VMEM),
    )(xc, ac, circ_w, bias_slab)

    # Column order r*T + u reshapes directly to (N, Fout, T); no transpose.
    return out_c.reshape(n, fout, t)


# --- pure-JAX reference (direct port of the PyTorch FFT code path) ------------
def _fft_product_ref(x, w):
    xf = jnp.fft.fft(x, axis=-1)
    wf = jnp.fft.fft(w, axis=-1)
    return jnp.real(jnp.fft.ifft(jnp.einsum('ijk,jrk->irk', xf, wf), axis=-1))


def reference(inp, adj, weight, bias):
    support = _fft_product_ref(inp, weight)
    output = _fft_product_ref(adj, support)
    return output + bias


if __name__ == "__main__":
    # Module hyper-params (small, consistent with the forward pass):
    T = 4      # channel_nums
    N = 16     # numnodes
    FIN = 32   # in_features
    FOUT = 16  # out_features

    key = jax.random.PRNGKey(0)
    k_x, k_a, k_w, k_b = jax.random.split(key, 4)

    inp = jax.random.normal(k_x, (N, FIN, T), dtype=jnp.float32)
    adj = jax.random.normal(k_a, (N, N, T), dtype=jnp.float32)

    # reset_parameters(): uniform(-stdv, stdv) with stdv = 1/sqrt(weight.size(1)).
    stdv = 1.0 / (FOUT ** 0.5)
    weight = jax.random.uniform(k_w, (FIN, FOUT, T), jnp.float32, -stdv, stdv)
    bias = jax.random.uniform(k_b, (N, FOUT, T), jnp.float32, -stdv, stdv)

    # Parameter-constant layout work done once, outside the per-forward path.
    circ_w, bias_slab = prepare_params(weight, bias)

    out = tensor_graph_convolution_fft(inp, adj, circ_w, bias_slab)
    out = jax.block_until_ready(out)

    ref = reference(inp, adj, weight, bias)
    assert out.shape == (N, FOUT, T)
    err = float(jnp.max(jnp.abs(out - ref)))
    assert jnp.allclose(out, ref, rtol=1e-4, atol=1e-3), (
        f"mismatch vs reference, max abs err {err}")
    print("KERNEL_OK")
</pallas_src>

<mosaic_0001>
module attributes {stable_mosaic.version = 11 : i64} {
  func.func @_tgcn_fft_kernel(%arg0: memref<16x128xf32, #tpu.memory_space<vmem>>, %arg1: memref<16x64xf32, #tpu.memory_space<vmem>>, %arg2: memref<128x64xf32, #tpu.memory_space<vmem>>, %arg3: memref<16x64xf32, #tpu.memory_space<vmem>>, %arg4: memref<16x64xf32, #tpu.memory_space<vmem>>) attributes {dimension_semantics = [], scalar_prefetch = 0 : i64, scratch_operands = 0 : i64, tpu.core_type = #tpu.core_type<tc>} {
    %c0 = arith.constant 0 : index
    %c0_0 = arith.constant 0 : index
    %0 = vector.load %arg0[%c0, %c0_0] : memref<16x128xf32, #tpu.memory_space<vmem>>, vector<16x128xf32>
    %c0_1 = arith.constant 0 : index
    %c0_2 = arith.constant 0 : index
    %1 = vector.load %arg1[%c0_1, %c0_2] : memref<16x64xf32, #tpu.memory_space<vmem>>, vector<16x64xf32>
    %c32_i32 = arith.constant 32 : i32
    %2 = tpu.dynamic_rotate %0 by %c32_i32 dim 1 : vector<16x128xf32>, i32 -> vector<16x128xf32>
    %c64_i32 = arith.constant 64 : i32
    %3 = tpu.dynamic_rotate %0 by %c64_i32 dim 1 : vector<16x128xf32>, i32 -> vector<16x128xf32>
    %c96_i32 = arith.constant 96 : i32
    %4 = tpu.dynamic_rotate %0 by %c96_i32 dim 1 : vector<16x128xf32>, i32 -> vector<16x128xf32>
    %5 = tpu.concatenate %0, %2, %3, %4 in 0 : vector<16x128xf32>, vector<16x128xf32>, vector<16x128xf32>, vector<16x128xf32> -> vector<64x128xf32>
    %cst = arith.constant dense<0.000000e+00> : vector<16x128xf32>
    %6 = tpu.matmul %1, %5, %cst {dimension_numbers = #tpu.dot_dimension_numbers<[1], [0], [0], [1], [0, 0, 1, 1], [], []>} : vector<16x64xf32>, vector<64x128xf32>, vector<16x128xf32> -> vector<16x128xf32>
    %c0_3 = arith.constant 0 : index
    %c0_4 = arith.constant 0 : index
    %7 = vector.load %arg2[%c0_3, %c0_4] : memref<128x64xf32, #tpu.memory_space<vmem>>, vector<128x64xf32>
    %cst_5 = arith.constant dense<0.000000e+00> : vector<16x64xf32>
    %8 = tpu.matmul %6, %7, %cst_5 {dimension_numbers = #tpu.dot_dimension_numbers<[1], [0], [0], [1], [0, 0, 1, 1], [], []>} : vector<16x128xf32>, vector<128x64xf32>, vector<16x64xf32> -> vector<16x64xf32>
    %c0_6 = arith.constant 0 : index
    %c0_7 = arith.constant 0 : index
    %9 = vector.load %arg3[%c0_6, %c0_7] : memref<16x64xf32, #tpu.memory_space<vmem>>, vector<16x64xf32>
    %10 = arith.addf %8, %9 : vector<16x64xf32>
    %c0_8 = arith.constant 0 : index
    %c0_9 = arith.constant 0 : index
    %11 = vector.load %arg4[%c0_8, %c0_9] : memref<16x64xf32, #tpu.memory_space<vmem>>, vector<16x64xf32>
    tpu.vector_store %arg4[%c0_8, %c0_9], %10 {strides = array<i32>} : memref<16x64xf32, #tpu.memory_space<vmem>>, vector<16x64xf32>,
    return
  }
}

</mosaic_0001>

<llo_original>
// kernel: tensor_graph_convolution_fft.1
$region0: #{tensor_graph_convolution_fft.1}
  #allocation0 [shape = 'u32[]', space=smem, size = 0x4, offset = 0x4, fixed_abs, tag = 'smem constant byte address 0x4 - core index']
  #allocation1 [shape = 'u32[144,128]{1,0:T(1,128)}', space=vmem, size = 0x12000, scoped, tag = 'internal scratch']
  %s0 = inlined_call_operand.vmem [shape: f32[16,128], index: 0, kind: input, shape index: {}]
  %s1 = inlined_call_operand.vmem [shape: f32[16,64], index: 1, kind: input, shape index: {}]
  %s2 = inlined_call_operand.vmem [shape: f32[128,64], index: 2, kind: input, shape index: {}]
  %s3 = inlined_call_operand.vmem [shape: f32[16,64], index: 3, kind: input, shape index: {}]
  %s4 = inlined_call_operand.vmem [shape: f32[16,64], index: 4, kind: output, shape index: {}]
  %s5 = sld [smem:[#allocation0]]
  $region26: #{tensor_graph_convolution_fft.1} parent=0
    _
  %s7 = ssub.s32 1, %s5
  %s8 = scalar_select 0, %s7, %s5
  // Predicated region
  $region2: #{tensor_graph_convolution_fft.1} parent=0 // pred_check
    _
  $region3: #{tensor_graph_convolution_fft.1} parent=0 // pred_check_branch
    %10 = sbr.rel (0) target = $region5
  $region4: #{tensor_graph_convolution_fft.1} parent=0 // pred_region
    _
  $region5: #{tensor_graph_convolution_fft.1} parent=0 // pred_fallthru
    _
  // Predicated region
  $region6: #{tensor_graph_convolution_fft.1} parent=0 // pred_check
    _
  $region7: #{tensor_graph_convolution_fft.1} parent=0 // pred_check_branch
    %12 = sbr.rel (0) target = $region9
  $region8: #{tensor_graph_convolution_fft.1} parent=0 // pred_region
    _
  $region9: #{tensor_graph_convolution_fft.1} parent=0 // pred_fallthru
    _
  // Predicated region
  $region10: #{tensor_graph_convolution_fft.1} parent=0 // pred_check
    _
  $region11: #{tensor_graph_convolution_fft.1} parent=0 // pred_check_branch
    %14 = sbr.rel (0) target = $region13
  $region12: #{tensor_graph_convolution_fft.1} parent=0 // pred_region
    _
  $region13: #{tensor_graph_convolution_fft.1} parent=0 // pred_fallthru
    _
  // Predicated region
  $region14: #{tensor_graph_convolution_fft.1} parent=0 // pred_check
    _
  $region15: #{tensor_graph_convolution_fft.1} parent=0 // pred_check_branch
    %16 = sbr.rel (0) target = $region17
  $region16: #{tensor_graph_convolution_fft.1} parent=0 // pred_region
    _
  $region17: #{tensor_graph_convolution_fft.1} parent=0 // pred_fallthru
    _
  %v17 = vld [vmem:[%s0] sm:$0xff]
  %v18 = vld [vmem:[%s0 + $0x8] sm:$0xff]
  %v19 = vld [vmem:[%s1] sm:$0xff]
  %v20 = vld [vmem:[%s1 + $0x8] sm:$0xff]
  %21 = vrot.lane.b32.xlu0 %v17, 32
  %v22 = vpop.permute.xlu0 %21
  %23 = vrot.lane.b32.xlu0 %v18, 32
  %v24 = vpop.permute.xlu0 %23
  %25 = vrot.lane.b32.xlu0 %v17, 64
  %v26 = vpop.permute.xlu0 %25
  %27 = vrot.lane.b32.xlu0 %v18, 64
  %v28 = vpop.permute.xlu0 %27
  %29 = vrot.lane.b32.xlu0 %v17, 96
  %v30 = vpop.permute.xlu0 %29
  %31 = vrot.lane.b32.xlu0 %v18, 96
  %v32 = vpop.permute.xlu0 %31
  %vm33 = vcmask 523264
  %v35 = vsel %vm33, %v19, 0
  %v38 = vsel %vm33, %v20, 0
  %40 = vmatprep.subr.mxu0 0.0
  %41 = vmatpush1.msra.mxu0 0.0
  %42 = vmatprep.subr.mxu0 0.0
  %43 = vmatpush1.msra.mxu0 0.0
  %44 = vmatprep.subr.mxu0 0.0
  %45 = vmatpush1.msra.mxu0 0.0
  %46 = vmatprep.subr.mxu0 0.0
  %47 = vmatpush1.msra.mxu0 0.0
  %48 = vmatprep.subr.mxu0 0.0
  %49 = vmatpush1.msra.mxu0 0.0
  %50 = vmatprep.subr.mxu0 0.0
  %51 = vmatpush1.msra.mxu0 0.0
  %52 = vmatprep.subr.mxu0 0.0
  %53 = vmatpush1.msra.mxu0 0.0
  %54 = vmatprep.subr.mxu0 0.0
  %55 = vmatpush1.msra.mxu0 0.0
  %56 = vmatprep.subr.mxu0 0.0
  %57 = vmatpush1.msra.mxu0 %v32
  %58 = vmatprep.subr.mxu0 0.0
  %59 = vmatpush1.msra.mxu0 %v30
  %60 = vmatprep.subr.mxu0 0.0
  %61 = vmatpush1.msra.mxu0 %v28
  %62 = vmatprep.subr.mxu0 0.0
  %63 = vmatpush1.msra.mxu0 %v26
  %64 = vmatprep.subr.mxu0 0.0
  %65 = vmatpush1.msra.mxu0 %v24
  %66 = vmatprep.subr.mxu0 0.0
  %67 = vmatpush1.msra.mxu0 %v22
  %68 = vmatprep.subr.mxu0 0.0
  %69 = vmatpush1.msra.mxu0 %v18
  %70 = vmatprep.subr.mxu0 0.0
  %71 = vmatpush1.msra.mxu0 %v17
  %72 = vmatprep.subr.mxu0 0.0
  %73 = vmatpush2.msra.mxu0 0.0
  %74 = vmatprep.subr.mxu0 0.0
  %75 = vmatpush2.msra.mxu0 0.0
  %76 = vmatprep.subr.mxu0 0.0
  %77 = vmatpush2.msra.mxu0 0.0
  %78 = vmatprep.subr.mxu0 0.0
  %79 = vmatpush2.msra.mxu0 0.0
  %80 = vmatprep.subr.mxu0 0.0
  %81 = vmatpush2.msra.mxu0 0.0
  %82 = vmatprep.subr.mxu0 0.0
  %83 = vmatpush2.msra.mxu0 0.0
  %84 = vmatprep.subr.mxu0 0.0
  %85 = vmatpush2.msra.mxu0 0.0
  %86 = vmatprep.subr.mxu0 0.0
  %87 = vmatpush2.msra.mxu0 0.0
  %88 = vmatprep.subr.mxu0 0.0
  %89 = vmatpush2.msra.mxu0 0.0
  %90 = vmatprep.subr.mxu0 0.0
  %91 = vmatpush2.msra.mxu0 0.0
  %92 = vmatprep.subr.mxu0 0.0
  %93 = vmatpush2.msra.mxu0 0.0
  %94 = vmatprep.subr.mxu0 0.0
  %95 = vmatpush2.msra.mxu0 0.0
  %96 = vmatprep.subr.mxu0 0.0
  %97 = vmatpush2.msra.mxu0 0.0
  %98 = vmatprep.subr.mxu0 0.0
  %99 = vmatpush2.msra.mxu0 0.0
  %100 = vmatprep.subr.mxu0 0.0
  %101 = vmatpush2.msra.mxu0 0.0
  %102 = vmatprep.subr.mxu0 0.0
  %103 = vmatpush2.msra.mxu0 0.0
  %104 = vmatprep.mubr.f32.mxu0 0.0
  %105 = vmatmul.mubr.f32.gmra.mxu0 %v35
  %v106 = vpop.f32.mrf.mxu0
  %v107 = vadd.f32 0.0, %v106
  %v108 = vpop.f32.mrf.mxu0
  %109 = vmatprep.mubr.f32.mxu0 0.0
  %110 = vmatmul.mubr.f32.gmra.mxu0 %v38
  %v111 = vpop.f32.mrf.mxu0
  %v112 = vadd.f32 0.0, %v111
  %v113 = vpop.f32.mrf.mxu0
  %114 = vdwg.mxu0
  %v115 = vld [vmem:[%s2] sm:$0xff]
  %v116 = vld [vmem:[%s2 + $0x8] sm:$0xff]
  %v117 = vld [vmem:[%s2 + $0x10] sm:$0xff]
  %v118 = vld [vmem:[%s2 + $0x18] sm:$0xff]
  %v119 = vld [vmem:[%s2 + $0x20] sm:$0xff]
  %v120 = vld [vmem:[%s2 + $0x28] sm:$0xff]
  %v121 = vld [vmem:[%s2 + $0x30] sm:$0xff]
  %v122 = vld [vmem:[%s2 + $0x38] sm:$0xff]
  %v123 = vld [vmem:[%s2 + $0x40] sm:$0xff]
  %v124 = vld [vmem:[%s2 + $0x48] sm:$0xff]
  %v125 = vld [vmem:[%s2 + $0x50] sm:$0xff]
  %v126 = vld [vmem:[%s2 + $0x58] sm:$0xff]
  %v127 = vld [vmem:[%s2 + $0x60] sm:$0xff]
  %v128 = vld [vmem:[%s2 + $0x68] sm:$0xff]
  %v129 = vld [vmem:[%s2 + $0x70] sm:$0xff]
  %v130 = vld [vmem:[%s2 + $0x78] sm:$0xff]
  %v131 = vld [vmem:[%s3] sm:$0xff]
  %v132 = vld [vmem:[%s3 + $0x8] sm:$0xff]
  %133 = vmatprep.subr.mxu0 0.0
  %134 = vmatpush1.msra.mxu0 %v130
  %135 = vmatprep.subr.mxu0 0.0
  %136 = vmatpush1.msra.mxu0 %v129
  %137 = vmatprep.subr.mxu0 0.0
  %138 = vmatpush1.msra.mxu0 %v128
  %139 = vmatprep.subr.mxu0 0.0
  %140 = vmatpush1.msra.mxu0 %v127
  %141 = vmatprep.subr.mxu0 0.0
  %142 = vmatpush1.msra.mxu0 %v126
  %143 = vmatprep.subr.mxu0 0.0
  %144 = vmatpush1.msra.mxu0 %v125
  %145 = vmatprep.subr.mxu0 0.0
  %146 = vmatpush1.msra.mxu0 %v124
  %147 = vmatprep.subr.mxu0 0.0
  %148 = vmatpush1.msra.mxu0 %v123
  %149 = vmatprep.subr.mxu0 0.0
  %150 = vmatpush1.msra.mxu0 %v122
  %151 = vmatprep.subr.mxu0 0.0
  %152 = vmatpush1.msra.mxu0 %v121
  %153 = vmatprep.subr.mxu0 0.0
  %154 = vmatpush1.msra.mxu0 %v120
  %155 = vmatprep.subr.mxu0 0.0
  %156 = vmatpush1.msra.mxu0 %v119
  %157 = vmatprep.subr.mxu0 0.0
  %158 = vmatpush1.msra.mxu0 %v118
  %159 = vmatprep.subr.mxu0 0.0
  %160 = vmatpush1.msra.mxu0 %v117
  %161 = vmatprep.subr.mxu0 0.0
  %162 = vmatpush1.msra.mxu0 %v116
  %163 = vmatprep.subr.mxu0 0.0
  %164 = vmatpush1.msra.mxu0 %v115
  %165 = vmatprep.subr.mxu0 0.0
  %166 = vmatpush2.msra.mxu0 0.0
  %167 = vmatprep.subr.mxu0 0.0
  %168 = vmatpush2.msra.mxu0 0.0
  %169 = vmatprep.subr.mxu0 0.0
  %170 = vmatpush2.msra.mxu0 0.0
  %171 = vmatprep.subr.mxu0 0.0
  %172 = vmatpush2.msra.mxu0 0.0
  %173 = vmatprep.subr.mxu0 0.0
  %174 = vmatpush2.msra.mxu0 0.0
  %175 = vmatprep.subr.mxu0 0.0
  %176 = vmatpush2.msra.mxu0 0.0
  %177 = vmatprep.subr.mxu0 0.0
  %178 = vmatpush2.msra.mxu0 0.0
  %179 = vmatprep.subr.mxu0 0.0
  %180 = vmatpush2.msra.mxu0 0.0
  %181 = vmatprep.subr.mxu0 0.0
  %182 = vmatpush2.msra.mxu0 0.0
  %183 = vmatprep.subr.mxu0 0.0
  %184 = vmatpush2.msra.mxu0 0.0
  %185 = vmatprep.subr.mxu0 0.0
  %186 = vmatpush2.msra.mxu0 0.0
  %187 = vmatprep.subr.mxu0 0.0
  %188 = vmatpush2.msra.mxu0 0.0
  %189 = vmatprep.subr.mxu0 0.0
  %190 = vmatpush2.msra.mxu0 0.0
  %191 = vmatprep.subr.mxu0 0.0
  %192 = vmatpush2.msra.mxu0 0.0
  %193 = vmatprep.subr.mxu0 0.0
  %194 = vmatpush2.msra.mxu0 0.0
  %195 = vmatprep.subr.mxu0 0.0
  %196 = vmatpush2.msra.mxu0 0.0
  %197 = vmatprep.mubr.f32.mxu0 0.0
  %198 = vmatmul.mubr.f32.gmra.mxu0 %v107
  %v199 = vpop.f32.mrf.mxu0
  %v200 = vadd.f32 %v131, %v199
  %v201 = vpop.f32.mrf.mxu0
  %202 = vmatprep.mubr.f32.mxu0 0.0
  %203 = vmatmul.mubr.f32.gmra.mxu0 %v112
  %v204 = vpop.f32.mrf.mxu0
  %v205 = vadd.f32 %v132, %v204
  %v206 = vpop.f32.mrf.mxu0
  %207 = vdwg.mxu0
  %208 = vst.msk [vmem:[%s4] sm:$0xff] %vm33, %v200
  %209 = vst.msk [vmem:[%s4 + $0x8] sm:$0xff] %vm33, %v205
  // Predicated region
  $region18: #{tensor_graph_convolution_fft.1} parent=0 // pred_check
    _
  $region19: #{tensor_graph_convolution_fft.1} parent=0 // pred_check_branch
    %211 = sbr.rel (0) target = $region21
  $region20: #{tensor_graph_convolution_fft.1} parent=0 // pred_region
    _
  $region21: #{tensor_graph_convolution_fft.1} parent=0 // pred_fallthru
    _
  // Predicated region
  $region22: #{tensor_graph_convolution_fft.1} parent=0 // pred_check
    _
  $region23: #{tensor_graph_convolution_fft.1} parent=0 // pred_check_branch
    %213 = sbr.rel (0) target = $region25
  $region24: #{tensor_graph_convolution_fft.1} parent=0 // pred_region
    _
  $region25: #{tensor_graph_convolution_fft.1} parent=0 // pred_fallthru
    _

</llo_original>
